<compile_context>
chip_gen: v7x
topology: tpu7x:2x2x1
jax: 0.10.0
libtpu: 0.0.40
codegen_flags: <defaults>
</compile_context>

<pallas_src>
import math

import jax
import jax.numpy as jnp
from jax.experimental import pallas as pl
from jax.experimental.pallas import tpu as pltpu

BN_EPS = 0.2                       # matches nn.BatchNorm1d(256, eps=0.2)
HEAD_SIZES = (3, 3, 6, 4)          # y1o, y2o, y3o, y4o output widths
HEAD_TOTAL = sum(HEAD_SIZES)       # 16
HIDDEN = 256
FEAT = 512


def _batchnorm_train(h, gamma, beta):
    """PyTorch BatchNorm1d training mode: biased batch variance, eps in sqrt.

    Two-pass centered variance (matches the reference formula; avoids the
    E[h^2]-E[h]^2 cancellation concern)."""
    mean = jnp.mean(h, axis=0, keepdims=True)
    c = h - mean
    var = jnp.mean(c * c, axis=0, keepdims=True)
    return c * jax.lax.rsqrt(var + BN_EPS) * gamma + beta


def _segmented_softmax(logits):
    """Per-head softmax over the packed [B,16] logits, heads = HEAD_SIZES.

    Per-head max / denominator built with broadcasted segment masks (full-lane
    reduces + selects) so there is a single full-tile result and store — no
    unaligned lane-slice extract/re-insert, no masked partial stores."""
    b, n = logits.shape
    lane = jax.lax.broadcasted_iota(jnp.int32, (1, n), 1)

    masks = []
    lo = 0
    for size in HEAD_SIZES:
        masks.append(jnp.logical_and(lane >= lo, lane < lo + size))
        lo += size

    neg_inf = jnp.float32(-jnp.inf)
    lane_max = jnp.zeros_like(logits)
    for m in masks:
        mh = jnp.max(jnp.where(m, logits, neg_inf), axis=-1, keepdims=True)
        lane_max = jnp.where(m, mh, lane_max)

    e = jnp.exp(logits - lane_max)

    lane_den = jnp.ones_like(logits)
    for m in masks:
        sh = jnp.sum(jnp.where(m, e, 0.0), axis=-1, keepdims=True)
        lane_den = jnp.where(m, sh, lane_den)

    return e * pl.reciprocal(lane_den, approx=True)


def head_kernel(feat_ref, w_ref, wyc_ref, p_ref, out_ref):
    # f32 -> bf16 cast done in-kernel (VPU work hidden under MXU slack); this
    # removes a standalone XLA convert op + extra HBM round trip of feat.
    feat = feat_ref[...].astype(jnp.bfloat16)                          # [B,512]

    # Stacked weight slab: rows 0:512 = W1, rows 512:768 = W2 (static slices).
    w1 = w_ref[0:FEAT, :]
    w2 = w_ref[FEAT:FEAT + HIDDEN, :]

    # Packed small-parameter slab [8,256]:
    b1, g1, be1 = p_ref[0:1, :], p_ref[1:2, :], p_ref[2:3, :]
    b2, g2, be2 = p_ref[3:4, :], p_ref[4:5, :], p_ref[5:6, :]
    byc = p_ref[6:7, 0:HEAD_TOTAL]                                     # [1,16]

    # Linear(512 -> 256) + ReLU + BatchNorm1d
    h = jnp.dot(feat, w1, preferred_element_type=jnp.float32)
    h = jnp.maximum(h + b1, 0.0)
    h1 = _batchnorm_train(h, g1, be1)                                  # [B,256] f32

    # Linear(256 -> 256) + ReLU + BatchNorm1d
    h = jnp.dot(h1.astype(jnp.bfloat16), w2, preferred_element_type=jnp.float32)
    h = jnp.maximum(h + b2, 0.0)
    h2 = _batchnorm_train(h, g2, be2)                                  # [B,256] f32

    # Fused output heads: one [256,16] matmul, segmented softmax, single store.
    logits = jnp.dot(h2.astype(jnp.bfloat16), wyc_ref[...],
                     preferred_element_type=jnp.float32) + byc         # [B,16]
    out_ref[...] = _segmented_softmax(logits)


def pack_params(p):
    """One-time packing / casting of the head parameters for the kernel."""
    byc = jnp.concatenate([p["by1"], p["by2"], p["by3"], p["by4"]], axis=1)  # [1,16]
    byc_row = jnp.pad(byc, ((0, 0), (0, HIDDEN - HEAD_TOTAL)))               # [1,256]
    pslab = jnp.concatenate(
        [p["b1"], p["g1"], p["be1"], p["b2"], p["g2"], p["be2"], byc_row,
         jnp.zeros((1, HIDDEN), jnp.float32)], axis=0)                       # [8,256] f32
    wslab = jnp.concatenate([p["w1"], p["w2"]], axis=0).astype(jnp.bfloat16)  # [768,256]
    wyc = jnp.concatenate(
        [p["wy1"], p["wy2"], p["wy3"], p["wy4"]], axis=1).astype(jnp.bfloat16)  # [256,16]
    return {"wslab": wslab, "wyc": wyc, "pslab": pslab}


def multi_output_head(feat, packed):
    """feat: [B,512] f32 features. Returns (y1 [B,3], y2 [B,3], y3 [B,6], y4 [B,4])."""
    B = feat.shape[0]
    full = pl.BlockSpec(memory_space=pltpu.MemorySpace.VMEM)  # whole-array, VMEM-resident

    out = pl.pallas_call(
        head_kernel,
        out_shape=jax.ShapeDtypeStruct((B, HEAD_TOTAL), jnp.float32),
        in_specs=[full] * 4,
        out_specs=full,
    )(feat, packed["wslab"], packed["wyc"], packed["pslab"])

    # Free layout plumbing: split the packed [B,16] slab into the 4 heads.
    y1 = out[:, 0:3]
    y2 = out[:, 3:6]
    y3 = out[:, 6:12]
    y4 = out[:, 12:16]
    return y1, y2, y3, y4


def _xavier_normal(key, fan_in, fan_out):
    # torch.nn.init.xavier_normal_ on a weight of shape [out, in]; stored as the
    # transposed [in, out] matrix so the kernel computes x @ W directly.
    std = math.sqrt(2.0 / (fan_in + fan_out))
    return std * jax.random.normal(key, (fan_in, fan_out), dtype=jnp.float32)


def _linear_bias(key, fan_in, fan_out):
    # PyTorch Linear default bias init: U(-1/sqrt(fan_in), 1/sqrt(fan_in))
    bound = 1.0 / math.sqrt(fan_in)
    return jax.random.uniform(
        key, (1, fan_out), minval=-bound, maxval=bound, dtype=jnp.float32)


def init_params(key):
    ks = jax.random.split(key, 12)
    return {
        "w1": _xavier_normal(ks[0], FEAT, HIDDEN),
        "b1": _linear_bias(ks[1], FEAT, HIDDEN),
        "g1": jnp.ones((1, HIDDEN), jnp.float32),
        "be1": jnp.zeros((1, HIDDEN), jnp.float32),
        "w2": _xavier_normal(ks[2], HIDDEN, HIDDEN),
        "b2": _linear_bias(ks[3], HIDDEN, HIDDEN),
        "g2": jnp.ones((1, HIDDEN), jnp.float32),
        "be2": jnp.zeros((1, HIDDEN), jnp.float32),
        "wy1": _xavier_normal(ks[4], HIDDEN, 3),
        "by1": _linear_bias(ks[5], HIDDEN, 3),
        "wy2": _xavier_normal(ks[6], HIDDEN, 3),
        "by2": _linear_bias(ks[7], HIDDEN, 3),
        "wy3": _xavier_normal(ks[8], HIDDEN, 6),
        "by3": _linear_bias(ks[9], HIDDEN, 6),
        "wy4": _xavier_normal(ks[10], HIDDEN, 4),
        "by4": _linear_bias(ks[11], HIDDEN, 4),
    }


def backbone_standin(x_nchw):
    # Stand-in for the injected resnet_model: NCHW -> [B, C] via global avg pool.
    return jnp.mean(x_nchw, axis=(2, 3))


def reference_head(feat, p):
    # Pure-f32 reference of the PyTorch forward (no bf16, exact reciprocal).
    def bn(h, g, be):
        m = jnp.mean(h, axis=0, keepdims=True)
        v = jnp.mean((h - m) ** 2, axis=0, keepdims=True)
        return (h - m) / jnp.sqrt(v + BN_EPS) * g + be

    h1 = bn(jnp.maximum(feat @ p["w1"] + p["b1"], 0.0), p["g1"], p["be1"])
    h2 = bn(jnp.maximum(h1 @ p["w2"] + p["b2"], 0.0), p["g2"], p["be2"])
    sm = lambda z: jax.nn.softmax(z, axis=-1)
    return (sm(h2 @ p["wy1"] + p["by1"]),
            sm(h2 @ p["wy2"] + p["by2"]),
            sm(h2 @ p["wy3"] + p["by3"]),
            sm(h2 @ p["wy4"] + p["by4"]))


if __name__ == "__main__":
    key = jax.random.PRNGKey(0)
    k_x, k_p = jax.random.split(key)

    # NCHW input to the (stand-in) backbone: batch=2, channels=512, spatial=4x4
    x = jax.random.normal(k_x, (2, 512, 4, 4), dtype=jnp.float32)
    params = init_params(k_p)
    packed = pack_params(params)

    feat = backbone_standin(x)                       # [2, 512] f32
    outs = multi_output_head(feat, packed)
    outs = jax.block_until_ready(outs)

    refs = reference_head(feat, params)
    for o, r in zip(outs, refs):
        assert o.shape == r.shape
        # approx-reciprocal softmax: rows sum to 1 within the EUP approx error.
        assert jnp.allclose(jnp.sum(o, axis=-1), 1.0, atol=5e-3)
        # bf16 matmul operands + approx reciprocal vs the f32 reference.
        assert jnp.allclose(o, r, atol=3e-2, rtol=3e-2)

    print("KERNEL_OK")
</pallas_src>

<mosaic_0001>
module attributes {stable_mosaic.version = 11 : i64} {
  func.func @head_kernel(%arg0: memref<2x512xf32, #tpu.memory_space<vmem>>, %arg1: memref<768x256xbf16, #tpu.memory_space<vmem>>, %arg2: memref<256x16xbf16, #tpu.memory_space<vmem>>, %arg3: memref<8x256xf32, #tpu.memory_space<vmem>>, %arg4: memref<2x16xf32, #tpu.memory_space<vmem>>) attributes {dimension_semantics = [], scalar_prefetch = 0 : i64, scratch_operands = 0 : i64, tpu.core_type = #tpu.core_type<tc>} {
    %c0 = arith.constant 0 : index
    %c0_0 = arith.constant 0 : index
    %0 = vector.load %arg0[%c0, %c0_0] : memref<2x512xf32, #tpu.memory_space<vmem>>, vector<2x512xf32>
    %1 = arith.truncf %0 : vector<2x512xf32> to vector<2x512xbf16>
    %c0_1 = arith.constant 0 : index
    %c0_2 = arith.constant 0 : index
    %2 = vector.load %arg1[%c0_1, %c0_2] : memref<768x256xbf16, #tpu.memory_space<vmem>>, vector<512x256xbf16>
    %c512 = arith.constant 512 : index
    %c0_3 = arith.constant 0 : index
    %3 = vector.load %arg1[%c512, %c0_3] : memref<768x256xbf16, #tpu.memory_space<vmem>>, vector<256x256xbf16>
    %c0_4 = arith.constant 0 : index
    %c0_5 = arith.constant 0 : index
    %4 = vector.load %arg3[%c0_4, %c0_5] : memref<8x256xf32, #tpu.memory_space<vmem>>, vector<1x256xf32>
    %c1 = arith.constant 1 : index
    %c0_6 = arith.constant 0 : index
    %5 = vector.load %arg3[%c1, %c0_6] : memref<8x256xf32, #tpu.memory_space<vmem>>, vector<1x256xf32>
    %c2 = arith.constant 2 : index
    %c0_7 = arith.constant 0 : index
    %6 = vector.load %arg3[%c2, %c0_7] : memref<8x256xf32, #tpu.memory_space<vmem>>, vector<1x256xf32>
    %c3 = arith.constant 3 : index
    %c0_8 = arith.constant 0 : index
    %7 = vector.load %arg3[%c3, %c0_8] : memref<8x256xf32, #tpu.memory_space<vmem>>, vector<1x256xf32>
    %c4 = arith.constant 4 : index
    %c0_9 = arith.constant 0 : index
    %8 = vector.load %arg3[%c4, %c0_9] : memref<8x256xf32, #tpu.memory_space<vmem>>, vector<1x256xf32>
    %c5 = arith.constant 5 : index
    %c0_10 = arith.constant 0 : index
    %9 = vector.load %arg3[%c5, %c0_10] : memref<8x256xf32, #tpu.memory_space<vmem>>, vector<1x256xf32>
    %c6 = arith.constant 6 : index
    %c0_11 = arith.constant 0 : index
    %10 = vector.load %arg3[%c6, %c0_11] : memref<8x256xf32, #tpu.memory_space<vmem>>, vector<1x16xf32>
    %cst = arith.constant dense<0.000000e+00> : vector<2x256xf32>
    %11 = tpu.matmul %1, %2, %cst {dimension_numbers = #tpu.dot_dimension_numbers<[1], [0], [0], [1], [0, 0, 1, 1], [], []>} : vector<2x512xbf16>, vector<512x256xbf16>, vector<2x256xf32> -> vector<2x256xf32>
    %12 = vector.broadcast %4 : vector<1x256xf32> to vector<2x256xf32>
    %13 = arith.addf %11, %12 : vector<2x256xf32>
    %cst_12 = arith.constant 0.000000e+00 : f32
    %14 = vector.broadcast %cst_12 : f32 to vector<2x256xf32>
    %15 = arith.maximumf %13, %14 : vector<2x256xf32>
    %cst_13 = arith.constant dense<0.000000e+00> : vector<256xf32>
    %16 = vector.multi_reduction <add>, %15, %cst_13 [0] : vector<2x256xf32> to vector<256xf32>
    %17 = vector.shape_cast %16 : vector<256xf32> to vector<1x256xf32>
    %cst_14 = arith.constant 2.000000e+00 : f32
    %18 = vector.broadcast %cst_14 : f32 to vector<1x256xf32>
    %19 = arith.divf %17, %18 : vector<1x256xf32>
    %20 = vector.broadcast %19 : vector<1x256xf32> to vector<2x256xf32>
    %21 = arith.subf %15, %20 : vector<2x256xf32>
    %22 = arith.mulf %21, %21 : vector<2x256xf32>
    %cst_15 = arith.constant dense<0.000000e+00> : vector<256xf32>
    %23 = vector.multi_reduction <add>, %22, %cst_15 [0] : vector<2x256xf32> to vector<256xf32>
    %24 = vector.shape_cast %23 : vector<256xf32> to vector<1x256xf32>
    %cst_16 = arith.constant 2.000000e+00 : f32
    %25 = vector.broadcast %cst_16 : f32 to vector<1x256xf32>
    %26 = arith.divf %24, %25 : vector<1x256xf32>
    %cst_17 = arith.constant 2.000000e-01 : f32
    %27 = vector.broadcast %cst_17 : f32 to vector<1x256xf32>
    %28 = arith.addf %26, %27 : vector<1x256xf32>
    %29 = math.rsqrt %28 : vector<1x256xf32>
    %30 = vector.broadcast %29 : vector<1x256xf32> to vector<2x256xf32>
    %31 = arith.mulf %21, %30 : vector<2x256xf32>
    %32 = vector.broadcast %5 : vector<1x256xf32> to vector<2x256xf32>
    %33 = arith.mulf %31, %32 : vector<2x256xf32>
    %34 = vector.broadcast %6 : vector<1x256xf32> to vector<2x256xf32>
    %35 = arith.addf %33, %34 : vector<2x256xf32>
    %36 = arith.truncf %35 : vector<2x256xf32> to vector<2x256xbf16>
    %cst_18 = arith.constant dense<0.000000e+00> : vector<2x256xf32>
    %37 = tpu.matmul %36, %3, %cst_18 {dimension_numbers = #tpu.dot_dimension_numbers<[1], [0], [0], [1], [0, 0, 1, 1], [], []>} : vector<2x256xbf16>, vector<256x256xbf16>, vector<2x256xf32> -> vector<2x256xf32>
    %38 = vector.broadcast %7 : vector<1x256xf32> to vector<2x256xf32>
    %39 = arith.addf %37, %38 : vector<2x256xf32>
    %cst_19 = arith.constant 0.000000e+00 : f32
    %40 = vector.broadcast %cst_19 : f32 to vector<2x256xf32>
    %41 = arith.maximumf %39, %40 : vector<2x256xf32>
    %cst_20 = arith.constant dense<0.000000e+00> : vector<256xf32>
    %42 = vector.multi_reduction <add>, %41, %cst_20 [0] : vector<2x256xf32> to vector<256xf32>
    %43 = vector.shape_cast %42 : vector<256xf32> to vector<1x256xf32>
    %cst_21 = arith.constant 2.000000e+00 : f32
    %44 = vector.broadcast %cst_21 : f32 to vector<1x256xf32>
    %45 = arith.divf %43, %44 : vector<1x256xf32>
    %46 = vector.broadcast %45 : vector<1x256xf32> to vector<2x256xf32>
    %47 = arith.subf %41, %46 : vector<2x256xf32>
    %48 = arith.mulf %47, %47 : vector<2x256xf32>
    %cst_22 = arith.constant dense<0.000000e+00> : vector<256xf32>
    %49 = vector.multi_reduction <add>, %48, %cst_22 [0] : vector<2x256xf32> to vector<256xf32>
    %50 = vector.shape_cast %49 : vector<256xf32> to vector<1x256xf32>
    %cst_23 = arith.constant 2.000000e+00 : f32
    %51 = vector.broadcast %cst_23 : f32 to vector<1x256xf32>
    %52 = arith.divf %50, %51 : vector<1x256xf32>
    %cst_24 = arith.constant 2.000000e-01 : f32
    %53 = vector.broadcast %cst_24 : f32 to vector<1x256xf32>
    %54 = arith.addf %52, %53 : vector<1x256xf32>
    %55 = math.rsqrt %54 : vector<1x256xf32>
    %56 = vector.broadcast %55 : vector<1x256xf32> to vector<2x256xf32>
    %57 = arith.mulf %47, %56 : vector<2x256xf32>
    %58 = vector.broadcast %8 : vector<1x256xf32> to vector<2x256xf32>
    %59 = arith.mulf %57, %58 : vector<2x256xf32>
    %60 = vector.broadcast %9 : vector<1x256xf32> to vector<2x256xf32>
    %61 = arith.addf %59, %60 : vector<2x256xf32>
    %62 = arith.truncf %61 : vector<2x256xf32> to vector<2x256xbf16>
    %c0_25 = arith.constant 0 : index
    %c0_26 = arith.constant 0 : index
    %63 = vector.load %arg2[%c0_25, %c0_26] : memref<256x16xbf16, #tpu.memory_space<vmem>>, vector<256x16xbf16>
    %cst_27 = arith.constant dense<0.000000e+00> : vector<2x16xf32>
    %64 = tpu.matmul %62, %63, %cst_27 {dimension_numbers = #tpu.dot_dimension_numbers<[1], [0], [0], [1], [0, 0, 1, 1], [], []>} : vector<2x256xbf16>, vector<256x16xbf16>, vector<2x16xf32> -> vector<2x16xf32>
    %65 = vector.broadcast %10 : vector<1x16xf32> to vector<2x16xf32>
    %66 = arith.addf %64, %65 : vector<2x16xf32>
    %67 = tpu.iota {dimensions = array<i32: 1>} : vector<1x16xi32>
    %c0_i32 = arith.constant 0 : i32
    %68 = vector.broadcast %c0_i32 : i32 to vector<1x16xi32>
    %69 = arith.cmpi sge, %67, %68 : vector<1x16xi32>
    %c3_i32 = arith.constant 3 : i32
    %70 = vector.broadcast %c3_i32 : i32 to vector<1x16xi32>
    %71 = arith.cmpi slt, %67, %70 : vector<1x16xi32>
    %72 = arith.andi %69, %71 : vector<1x16xi1>
    %c3_i32_28 = arith.constant 3 : i32
    %73 = vector.broadcast %c3_i32_28 : i32 to vector<1x16xi32>
    %74 = arith.cmpi sge, %67, %73 : vector<1x16xi32>
    %c6_i32 = arith.constant 6 : i32
    %75 = vector.broadcast %c6_i32 : i32 to vector<1x16xi32>
    %76 = arith.cmpi slt, %67, %75 : vector<1x16xi32>
    %77 = arith.andi %74, %76 : vector<1x16xi1>
    %c6_i32_29 = arith.constant 6 : i32
    %78 = vector.broadcast %c6_i32_29 : i32 to vector<1x16xi32>
    %79 = arith.cmpi sge, %67, %78 : vector<1x16xi32>
    %c12_i32 = arith.constant 12 : i32
    %80 = vector.broadcast %c12_i32 : i32 to vector<1x16xi32>
    %81 = arith.cmpi slt, %67, %80 : vector<1x16xi32>
    %82 = arith.andi %79, %81 : vector<1x16xi1>
    %c12_i32_30 = arith.constant 12 : i32
    %83 = vector.broadcast %c12_i32_30 : i32 to vector<1x16xi32>
    %84 = arith.cmpi sge, %67, %83 : vector<1x16xi32>
    %c16_i32 = arith.constant 16 : i32
    %85 = vector.broadcast %c16_i32 : i32 to vector<1x16xi32>
    %86 = arith.cmpi slt, %67, %85 : vector<1x16xi32>
    %87 = arith.andi %84, %86 : vector<1x16xi1>
    %cst_31 = arith.constant 0.000000e+00 : f32
    %88 = vector.broadcast %cst_31 : f32 to vector<2x16xf32>
    %cst_32 = arith.constant 0xFF800000 : f32
    %89 = vector.shape_cast %72 : vector<1x16xi1> to vector<1x16xi1>
    %90 = vector.broadcast %89 : vector<1x16xi1> to vector<2x16xi1>
    %91 = vector.broadcast %cst_32 : f32 to vector<2x16xf32>
    %92 = arith.select %90, %66, %91 : vector<2x16xi1>, vector<2x16xf32>
    %cst_33 = arith.constant dense<0xFF800000> : vector<2xf32>
    %93 = vector.multi_reduction <maximumf>, %92, %cst_33 [1] : vector<2x16xf32> to vector<2xf32>
    %94 = vector.shape_cast %93 : vector<2xf32> to vector<2x1xf32>
    %95 = vector.shape_cast %72 : vector<1x16xi1> to vector<1x16xi1>
    %96 = vector.broadcast %95 : vector<1x16xi1> to vector<2x16xi1>
    %97 = vector.shape_cast %94 : vector<2x1xf32> to vector<2x1xf32>
    %98 = vector.broadcast %97 : vector<2x1xf32> to vector<2x16xf32>
    %99 = arith.select %96, %98, %88 : vector<2x16xi1>, vector<2x16xf32>
    %cst_34 = arith.constant 0xFF800000 : f32
    %100 = vector.shape_cast %77 : vector<1x16xi1> to vector<1x16xi1>
    %101 = vector.broadcast %100 : vector<1x16xi1> to vector<2x16xi1>
    %102 = vector.broadcast %cst_34 : f32 to vector<2x16xf32>
    %103 = arith.select %101, %66, %102 : vector<2x16xi1>, vector<2x16xf32>
    %cst_35 = arith.constant dense<0xFF800000> : vector<2xf32>
    %104 = vector.multi_reduction <maximumf>, %103, %cst_35 [1] : vector<2x16xf32> to vector<2xf32>
    %105 = vector.shape_cast %104 : vector<2xf32> to vector<2x1xf32>
    %106 = vector.shape_cast %77 : vector<1x16xi1> to vector<1x16xi1>
    %107 = vector.broadcast %106 : vector<1x16xi1> to vector<2x16xi1>
    %108 = vector.shape_cast %105 : vector<2x1xf32> to vector<2x1xf32>
    %109 = vector.broadcast %108 : vector<2x1xf32> to vector<2x16xf32>
    %110 = arith.select %107, %109, %99 : vector<2x16xi1>, vector<2x16xf32>
    %cst_36 = arith.constant 0xFF800000 : f32
    %111 = vector.shape_cast %82 : vector<1x16xi1> to vector<1x16xi1>
    %112 = vector.broadcast %111 : vector<1x16xi1> to vector<2x16xi1>
    %113 = vector.broadcast %cst_36 : f32 to vector<2x16xf32>
    %114 = arith.select %112, %66, %113 : vector<2x16xi1>, vector<2x16xf32>
    %cst_37 = arith.constant dense<0xFF800000> : vector<2xf32>
    %115 = vector.multi_reduction <maximumf>, %114, %cst_37 [1] : vector<2x16xf32> to vector<2xf32>
    %116 = vector.shape_cast %115 : vector<2xf32> to vector<2x1xf32>
    %117 = vector.shape_cast %82 : vector<1x16xi1> to vector<1x16xi1>
    %118 = vector.broadcast %117 : vector<1x16xi1> to vector<2x16xi1>
    %119 = vector.shape_cast %116 : vector<2x1xf32> to vector<2x1xf32>
    %120 = vector.broadcast %119 : vector<2x1xf32> to vector<2x16xf32>
    %121 = arith.select %118, %120, %110 : vector<2x16xi1>, vector<2x16xf32>
    %cst_38 = arith.constant 0xFF800000 : f32
    %122 = vector.shape_cast %87 : vector<1x16xi1> to vector<1x16xi1>
    %123 = vector.broadcast %122 : vector<1x16xi1> to vector<2x16xi1>
    %124 = vector.broadcast %cst_38 : f32 to vector<2x16xf32>
    %125 = arith.select %123, %66, %124 : vector<2x16xi1>, vector<2x16xf32>
    %cst_39 = arith.constant dense<0xFF800000> : vector<2xf32>
    %126 = vector.multi_reduction <maximumf>, %125, %cst_39 [1] : vector<2x16xf32> to vector<2xf32>
    %127 = vector.shape_cast %126 : vector<2xf32> to vector<2x1xf32>
    %128 = vector.shape_cast %87 : vector<1x16xi1> to vector<1x16xi1>
    %129 = vector.broadcast %128 : vector<1x16xi1> to vector<2x16xi1>
    %130 = vector.shape_cast %127 : vector<2x1xf32> to vector<2x1xf32>
    %131 = vector.broadcast %130 : vector<2x1xf32> to vector<2x16xf32>
    %132 = arith.select %129, %131, %121 : vector<2x16xi1>, vector<2x16xf32>
    %133 = arith.subf %66, %132 : vector<2x16xf32>
    %134 = math.exp %133 : vector<2x16xf32>
    %cst_40 = arith.constant 1.000000e+00 : f32
    %135 = vector.broadcast %cst_40 : f32 to vector<2x16xf32>
    %cst_41 = arith.constant 0.000000e+00 : f32
    %136 = vector.shape_cast %72 : vector<1x16xi1> to vector<1x16xi1>
    %137 = vector.broadcast %136 : vector<1x16xi1> to vector<2x16xi1>
    %138 = vector.broadcast %cst_41 : f32 to vector<2x16xf32>
    %139 = arith.select %137, %134, %138 : vector<2x16xi1>, vector<2x16xf32>
    %cst_42 = arith.constant dense<0.000000e+00> : vector<2xf32>
    %140 = vector.multi_reduction <add>, %139, %cst_42 [1] : vector<2x16xf32> to vector<2xf32>
    %141 = vector.shape_cast %140 : vector<2xf32> to vector<2x1xf32>
    %142 = vector.shape_cast %72 : vector<1x16xi1> to vector<1x16xi1>
    %143 = vector.broadcast %142 : vector<1x16xi1> to vector<2x16xi1>
    %144 = vector.shape_cast %141 : vector<2x1xf32> to vector<2x1xf32>
    %145 = vector.broadcast %144 : vector<2x1xf32> to vector<2x16xf32>
    %146 = arith.select %143, %145, %135 : vector<2x16xi1>, vector<2x16xf32>
    %cst_43 = arith.constant 0.000000e+00 : f32
    %147 = vector.shape_cast %77 : vector<1x16xi1> to vector<1x16xi1>
    %148 = vector.broadcast %147 : vector<1x16xi1> to vector<2x16xi1>
    %149 = vector.broadcast %cst_43 : f32 to vector<2x16xf32>
    %150 = arith.select %148, %134, %149 : vector<2x16xi1>, vector<2x16xf32>
    %cst_44 = arith.constant dense<0.000000e+00> : vector<2xf32>
    %151 = vector.multi_reduction <add>, %150, %cst_44 [1] : vector<2x16xf32> to vector<2xf32>
    %152 = vector.shape_cast %151 : vector<2xf32> to vector<2x1xf32>
    %153 = vector.shape_cast %77 : vector<1x16xi1> to vector<1x16xi1>
    %154 = vector.broadcast %153 : vector<1x16xi1> to vector<2x16xi1>
    %155 = vector.shape_cast %152 : vector<2x1xf32> to vector<2x1xf32>
    %156 = vector.broadcast %155 : vector<2x1xf32> to vector<2x16xf32>
    %157 = arith.select %154, %156, %146 : vector<2x16xi1>, vector<2x16xf32>
    %cst_45 = arith.constant 0.000000e+00 : f32
    %158 = vector.shape_cast %82 : vector<1x16xi1> to vector<1x16xi1>
    %159 = vector.broadcast %158 : vector<1x16xi1> to vector<2x16xi1>
    %160 = vector.broadcast %cst_45 : f32 to vector<2x16xf32>
    %161 = arith.select %159, %134, %160 : vector<2x16xi1>, vector<2x16xf32>
    %cst_46 = arith.constant dense<0.000000e+00> : vector<2xf32>
    %162 = vector.multi_reduction <add>, %161, %cst_46 [1] : vector<2x16xf32> to vector<2xf32>
    %163 = vector.shape_cast %162 : vector<2xf32> to vector<2x1xf32>
    %164 = vector.shape_cast %82 : vector<1x16xi1> to vector<1x16xi1>
    %165 = vector.broadcast %164 : vector<1x16xi1> to vector<2x16xi1>
    %166 = vector.shape_cast %163 : vector<2x1xf32> to vector<2x1xf32>
    %167 = vector.broadcast %166 : vector<2x1xf32> to vector<2x16xf32>
    %168 = arith.select %165, %167, %157 : vector<2x16xi1>, vector<2x16xf32>
    %cst_47 = arith.constant 0.000000e+00 : f32
    %169 = vector.shape_cast %87 : vector<1x16xi1> to vector<1x16xi1>
    %170 = vector.broadcast %169 : vector<1x16xi1> to vector<2x16xi1>
    %171 = vector.broadcast %cst_47 : f32 to vector<2x16xf32>
    %172 = arith.select %170, %134, %171 : vector<2x16xi1>, vector<2x16xf32>
    %cst_48 = arith.constant dense<0.000000e+00> : vector<2xf32>
    %173 = vector.multi_reduction <add>, %172, %cst_48 [1] : vector<2x16xf32> to vector<2xf32>
    %174 = vector.shape_cast %173 : vector<2xf32> to vector<2x1xf32>
    %175 = vector.shape_cast %87 : vector<1x16xi1> to vector<1x16xi1>
    %176 = vector.broadcast %175 : vector<1x16xi1> to vector<2x16xi1>
    %177 = vector.shape_cast %174 : vector<2x1xf32> to vector<2x1xf32>
    %178 = vector.broadcast %177 : vector<2x1xf32> to vector<2x16xf32>
    %179 = arith.select %176, %178, %168 : vector<2x16xi1>, vector<2x16xf32>
    %180 = tpu.reciprocal %179 {approx = true} : vector<2x16xf32> -> vector<2x16xf32>
    %181 = arith.mulf %134, %180 : vector<2x16xf32>
    %c0_49 = arith.constant 0 : index
    %c0_50 = arith.constant 0 : index
    %182 = vector.load %arg4[%c0_49, %c0_50] : memref<2x16xf32, #tpu.memory_space<vmem>>, vector<2x16xf32>
    tpu.vector_store %arg4[%c0_49, %c0_50], %181 {strides = array<i32>} : memref<2x16xf32, #tpu.memory_space<vmem>>, vector<2x16xf32>,
    return
  }
}

</mosaic_0001>

<llo_original>
// kernel: tpu_custom_call.1
$region0: #{tpu_custom_call.1}
  #allocation0 [shape = 'u32[]', space=smem, size = 0x4, offset = 0x4, fixed_abs, tag = 'smem constant byte address 0x4 - core index']
  #allocation1 [shape = 'u32[144,128]{1,0:T(1,128)}', space=vmem, size = 0x12000, scoped, tag = 'internal scratch']
  %s0 = inlined_call_operand.vmem [shape: f32[2,512], index: 0, kind: input, shape index: {}]
  %s1 = inlined_call_operand.hbm [shape: bf16[768,256], index: 1, kind: input, shape index: {}]
  %s2 = inlined_call_operand.vmem [shape: bf16[256,16], index: 2, kind: input, shape index: {}]
  %s3 = inlined_call_operand.vmem [shape: f32[8,256], index: 3, kind: input, shape index: {}]
  %s4 = inlined_call_operand.hbm [shape: f32[2,16], index: 4, kind: output, shape index: {}]
  %s5 = sld [smem:[#allocation0]]
  $region30: #{tpu_custom_call.1} parent=0
    _
  %s7 = ssub.s32 1, %s5
  %s8 = scalar_select 0, %s7, %s5
  $region1: #{tpu_custom_call.1} parent=0
    #allocation2 [shape = 'u8[393216]{0}', space=vmem, size = 0x60000, scoped, tag = 'input window, operand 1, single buffered']
    #allocation3 [shape = 's32[1]{0}', space=sflag, size = 0x4, scoped, tag = 'scoped memory for tpu_custom_call.1']
    #allocation4 [shape = 's32[1]{0}', space=sflag, size = 0x4, scoped, tag = 'scoped memory for tpu_custom_call.1']
    #allocation5 [shape = 'u8[1024]{0}', space=vmem, size = 0x400, scoped, tag = 'output window, operand 0, single buffered']
    %9 = vsyncpa [#allocation3], 0
    %10 = vsyncpa [#allocation4], 0
    // Predicated region
    $region2: #{tpu_custom_call.1} parent=1 // pred_check
      _
    $region3: #{tpu_custom_call.1} parent=1 // pred_check_branch
      %12 = sbr.rel (0) target = $region5
    $region4: #{tpu_custom_call.1} parent=1 // pred_region
      _
    $region5: #{tpu_custom_call.1} parent=1 // pred_fallthru
      _
    // Predicated region
    $region6: #{tpu_custom_call.1} parent=1 // pred_check
      _
    $region7: #{tpu_custom_call.1} parent=1 // pred_check_branch
      %14 = sbr.rel (0) target = $region9
    $region8: #{tpu_custom_call.1} parent=1 // pred_region
      %s16 = ssub.s32 12288, 12288
      %17 = vsyncadd [#allocation3], %s16
      %s18 = sshll.u32 [#allocation2], 4
      %s19 = int_to_ptr.vmem [resolvable:$true] %s18
      %24 = dma.hbm_to_vmem [thread:$0]  %s1, 12288, %s19, [#allocation3], 128, 128, 8
    $region9: #{tpu_custom_call.1} parent=1 // pred_fallthru
      _
    // Predicated region
    $region10: #{tpu_custom_call.1} parent=1 // pred_check
      _
    $region11: #{tpu_custom_call.1} parent=1 // pred_check_branch
      %26 = sbr.rel (0) target = $region13
    $region12: #{tpu_custom_call.1} parent=1 // pred_region
      _
    $region13: #{tpu_custom_call.1} parent=1 // pred_fallthru
      _
    // Predicated region
    $region14: #{tpu_custom_call.1} parent=1 // pred_check
      _
    $region15: #{tpu_custom_call.1} parent=1 // pred_check_branch
      %28 = sbr.rel (0) target = $region17
    $region16: #{tpu_custom_call.1} parent=1 // pred_region
      _
    $region17: #{tpu_custom_call.1} parent=1 // pred_fallthru
      _
    // Predicated region
    $region18: #{tpu_custom_call.1} parent=1 // pred_check
      _
    $region19: #{tpu_custom_call.1} parent=1 // pred_check_branch
      %30 = sbr.rel (0) target = $region21
    $region20: #{tpu_custom_call.1} parent=1 // pred_region
      %31 = dma.done [#allocation3], 12288
    $region21: #{tpu_custom_call.1} parent=1 // pred_fallthru
      _
    %v33 = vld [vmem:[%s0] sm:$0xff]
    %v35 = vcombine.high %v33, %v33
    %v37 = vunpack.c.l.s4 1983009808
    %v38 = vunpack.c.0.s8 %v37
    %v39 = vlaneseq
    %v40 = vshrl.u32 %v39, 7
    %v41 = vsub.s32 %v38, %v40
    %v42 = vrot.slane %v33, %v41
    %v44 = vunpack.c.l.s4 1983009808
    %v45 = vunpack.c.0.s8 %v44
    %v46 = vlaneseq
    %v47 = vshrl.u32 %v46, 7
    %v48 = vsub.s32 %v45, %v47
    %v49 = vrot.slane %v35, %v48
    %v50 = vcombine.high %v42, %v42
    %v51 = vcombine.high %v49, %v49
    %v56 = vpack.c.bf16 %v42, %v42
    %v57 = vpack.c.bf16 %v50, %v50
    %v58 = vpack.c.bf16 %v49, %v49
    %v59 = vpack.c.bf16 %v51, %v51
    %v60 = vld [vmem:[#allocation2] sm:$0xff]
    %v61 = vld [vmem:[#allocation2 + $0x8] sm:$0xff]
    %v62 = vld [vmem:[#allocation2 + $0x10] sm:$0xff]
    %v63 = vld [vmem:[#allocation2 + $0x18] sm:$0xff]
    %v64 = vld [vmem:[#allocation2 + $0x20] sm:$0xff]
    %v65 = vld [vmem:[#allocation2 + $0x28] sm:$0xff]
    %v66 = vld [vmem:[#allocation2 + $0x30] sm:$0xff]
    %v67 = vld [vmem:[#allocation2 + $0x38] sm:$0xff]
    %v68 = vld [vmem:[#allocation2 + $0x40] sm:$0xff]
    %v69 = vld [vmem:[#allocation2 + $0x48] sm:$0xff]
    %v70 = vld [vmem:[#allocation2 + $0x50] sm:$0xff]
    %v71 = vld [vmem:[#allocation2 + $0x58] sm:$0xff]
    %v72 = vld [vmem:[#allocation2 + $0x60] sm:$0xff]
    %v73 = vld [vmem:[#allocation2 + $0x68] sm:$0xff]
    %v74 = vld [vmem:[#allocation2 + $0x70] sm:$0xff]
    %v75 = vld [vmem:[#allocation2 + $0x78] sm:$0xff]
    %v76 = vld [vmem:[#allocation2 + $0x80] sm:$0xff]
    %v77 = vld [vmem:[#allocation2 + $0x88] sm:$0xff]
    %v78 = vld [vmem:[#allocation2 + $0x90] sm:$0xff]
    %v79 = vld [vmem:[#allocation2 + $0x98] sm:$0xff]
    %v80 = vld [vmem:[#allocation2 + $0xa0] sm:$0xff]
    %v81 = vld [vmem:[#allocation2 + $0xa8] sm:$0xff]
    %v82 = vld [vmem:[#allocation2 + $0xb0] sm:$0xff]
    %v83 = vld [vmem:[#allocation2 + $0xb8] sm:$0xff]
    %v84 = vld [vmem:[#allocation2 + $0xc0] sm:$0xff]
    %v85 = vld [vmem:[#allocation2 + $0xc8] sm:$0xff]
    %v86 = vld [vmem:[#allocation2 + $0xd0] sm:$0xff]
    %v87 = vld [vmem:[#allocation2 + $0xd8] sm:$0xff]
    %v88 = vld [vmem:[#allocation2 + $0xe0] sm:$0xff]
    %v89 = vld [vmem:[#allocation2 + $0xe8] sm:$0xff]
    %v90 = vld [vmem:[#allocation2 + $0xf0] sm:$0xff]
    %v91 = vld [vmem:[#allocation2 + $0xf8] sm:$0xff]
    %v92 = vld [vmem:[#allocation2 + $0x100] sm:$0xff]
    %v93 = vld [vmem:[#allocation2 + $0x108] sm:$0xff]
    %v94 = vld [vmem:[#allocation2 + $0x110] sm:$0xff]
    %v95 = vld [vmem:[#allocation2 + $0x118] sm:$0xff]
    %v96 = vld [vmem:[#allocation2 + $0x120] sm:$0xff]
    %v97 = vld [vmem:[#allocation2 + $0x128] sm:$0xff]
    %v98 = vld [vmem:[#allocation2 + $0x130] sm:$0xff]
    %v99 = vld [vmem:[#allocation2 + $0x138] sm:$0xff]
    %v100 = vld [vmem:[#allocation2 + $0x140] sm:$0xff]
    %v101 = vld [vmem:[#allocation2 + $0x148] sm:$0xff]
    %v102 = vld [vmem:[#allocation2 + $0x150] sm:$0xff]
    %v103 = vld [vmem:[#allocation2 + $0x158] sm:$0xff]
    %v104 = vld [vmem:[#allocation2 + $0x160] sm:$0xff]
    %v105 = vld [vmem:[#allocation2 + $0x168] sm:$0xff]
    %v106 = vld [vmem:[#allocation2 + $0x170] sm:$0xff]
    %v107 = vld [vmem:[#allocation2 + $0x178] sm:$0xff]
    %v108 = vld [vmem:[#allocation2 + $0x180] sm:$0xff]
    %v109 = vld [vmem:[#allocation2 + $0x188] sm:$0xff]
    %v110 = vld [vmem:[#allocation2 + $0x190] sm:$0xff]
    %v111 = vld [vmem:[#allocation2 + $0x198] sm:$0xff]
    %v112 = vld [vmem:[#allocation2 + $0x1a0] sm:$0xff]
    %v113 = vld [vmem:[#allocation2 + $0x1a8] sm:$0xff]
    %v114 = vld [vmem:[#allocation2 + $0x1b0] sm:$0xff]
    %v115 = vld [vmem:[#allocation2 + $0x1b8] sm:$0xff]
    %v116 = vld [vmem:[#allocation2 + $0x1c0] sm:$0xff]
    %v117 = vld [vmem:[#allocation2 + $0x1c8] sm:$0xff]
    %v118 = vld [vmem:[#allocation2 + $0x1d0] sm:$0xff]
    %v119 = vld [vmem:[#allocation2 + $0x1d8] sm:$0xff]
    %v120 = vld [vmem:[#allocation2 + $0x1e0] sm:$0xff]
    %v121 = vld [vmem:[#allocation2 + $0x1e8] sm:$0xff]
    %v122 = vld [vmem:[#allocation2 + $0x1f0] sm:$0xff]
    %v123 = vld [vmem:[#allocation2 + $0x1f8] sm:$0xff]
    %v124 = vld [vmem:[#allocation2 + $0x200] sm:$0xff]
    %v125 = vld [vmem:[#allocation2 + $0x208] sm:$0xff]
    %v126 = vld [vmem:[#allocation2 + $0x210] sm:$0xff]
    %v127 = vld [vmem:[#allocation2 + $0x218] sm:$0xff]
    %v128 = vld [vmem:[#allocation2 + $0x220] sm:$0xff]
    %v129 = vld [vmem:[#allocation2 + $0x228] sm:$0xff]
    %v130 = vld [vmem:[#allocation2 + $0x230] sm:$0xff]
    %v131 = vld [vmem:[#allocation2 + $0x238] sm:$0xff]
    %v132 = vld [vmem:[#allocation2 + $0x240] sm:$0xff]
    %v133 = vld [vmem:[#allocation2 + $0x248] sm:$0xff]
    %v134 = vld [vmem:[#allocation2 + $0x250] sm:$0xff]
    %v135 = vld [vmem:[#allocation2 + $0x258] sm:$0xff]
    %v136 = vld [vmem:[#allocation2 + $0x260] sm:$0xff]
    %v137 = vld [vmem:[#allocation2 + $0x268] sm:$0xff]
    %v138 = vld [vmem:[#allocation2 + $0x270] sm:$0xff]
    %v139 = vld [vmem:[#allocation2 + $0x278] sm:$0xff]
    %v140 = vld [vmem:[#allocation2 + $0x280] sm:$0xff]
    %v141 = vld [vmem:[#allocation2 + $0x288] sm:$0xff]
    %v142 = vld [vmem:[#allocation2 + $0x290] sm:$0xff]
    %v143 = vld [vmem:[#allocation2 + $0x298] sm:$0xff]
    %v144 = vld [vmem:[#allocation2 + $0x2a0] sm:$0xff]
    %v145 = vld [vmem:[#allocation2 + $0x2a8] sm:$0xff]
    %v146 = vld [vmem:[#allocation2 + $0x2b0] sm:$0xff]
    %v147 = vld [vmem:[#allocation2 + $0x2b8] sm:$0xff]
    %v148 = vld [vmem:[#allocation2 + $0x2c0] sm:$0xff]
    %v149 = vld [vmem:[#allocation2 + $0x2c8] sm:$0xff]
    %v150 = vld [vmem:[#allocation2 + $0x2d0] sm:$0xff]
    %v151 = vld [vmem:[#allocation2 + $0x2d8] sm:$0xff]
    %v152 = vld [vmem:[#allocation2 + $0x2e0] sm:$0xff]
    %v153 = vld [vmem:[#allocation2 + $0x2e8] sm:$0xff]
    %v154 = vld [vmem:[#allocation2 + $0x2f0] sm:$0xff]
    %v155 = vld [vmem:[#allocation2 + $0x2f8] sm:$0xff]
    %v156 = vld [vmem:[%s3] ss:$8 sm:$0x3]
    %s157 = scalar_lea.vmem %s3, 1
    %v158 = vld [vmem:[%s157] ss:$8 sm:$0x3]
    %s159 = scalar_lea.vmem %s3, 2
    %v160 = vld [vmem:[%s159] ss:$8 sm:$0x3]
    %s161 = scalar_lea.vmem %s3, 3
    %v162 = vld [vmem:[%s161] ss:$8 sm:$0x3]
    %s163 = scalar_lea.vmem %s3, 4
    %v164 = vld [vmem:[%s163] ss:$8 sm:$0x3]
    %s165 = scalar_lea.vmem %s3, 5
    %v166 = vld [vmem:[%s165] ss:$8 sm:$0x3]
    %v167 = vld [vmem:[%s3 + $0x6] ss:$0 sm:$0xff]
    %v169 = vlaneseq
    %v170 = vshrl.u32 %v169, 7
    %v171 = vsub.s32 0, %v170
    %v172 = vrot.slane %v156, %v171
    %v173 = vlaneseq
    %v174 = vshrl.u32 %v173, 7
    %v175 = vsub.s32 1, %v174
    %v176 = vrot.slane %v156, %v175
    %v243 = vunpack.c.l.b16 %v60
    %v244 = vunpack.c.h.b16 %v60
    %v245 = vunpack.c.l.b16 %v61
    %v246 = vunpack.c.h.b16 %v61
    %v247 = vunpack.c.l.b16 %v62
    %v248 = vunpack.c.h.b16 %v62
    %v249 = vunpack.c.l.b16 %v63
    %v250 = vunpack.c.h.b16 %v63
    %v251 = vunpack.c.l.b16 %v64
    %v252 = vunpack.c.h.b16 %v64
    %v253 = vunpack.c.l.b16 %v65
    %v254 = vunpack.c.h.b16 %v65
    %v255 = vunpack.c.l.b16 %v66
    %v256 = vunpack.c.h.b16 %v66
    %v257 = vunpack.c.l.b16 %v67
    %v258 = vunpack.c.h.b16 %v67
    %v259 = vunpack.c.l.b16 %v68
    %v260 = vunpack.c.h.b16 %v68
    %v261 = vunpack.c.l.b16 %v69
    %v262 = vunpack.c.h.b16 %v69
    %v263 = vunpack.c.l.b16 %v70
    %v264 = vunpack.c.h.b16 %v70
    %v265 = vunpack.c.l.b16 %v71
    %v266 = vunpack.c.h.b16 %v71
    %v267 = vunpack.c.l.b16 %v72
    %v268 = vunpack.c.h.b16 %v72
    %v269 = vunpack.c.l.b16 %v73
    %v270 = vunpack.c.h.b16 %v73
    %v271 = vunpack.c.l.b16 %v74
    %v272 = vunpack.c.h.b16 %v74
    %v273 = vunpack.c.l.b16 %v75
    %v274 = vunpack.c.h.b16 %v75
    %v275 = vunpack.c.l.b16 %v76
    %v276 = vunpack.c.h.b16 %v76
    %v277 = vunpack.c.l.b16 %v77
    %v278 = vunpack.c.h.b16 %v77
    %v279 = vunpack.c.l.b16 %v78
    %v280 = vunpack.c.h.b16 %v78
    %v281 = vunpack.c.l.b16 %v79
    %v282 = vunpack.c.h.b16 %v79
    %v283 = vunpack.c.l.b16 %v80
    %v284 = vunpack.c.h.b16 %v80
    %v285 = vunpack.c.l.b16 %v81
    %v286 = vunpack.c.h.b16 %v81
    %v287 = vunpack.c.l.b16 %v82
    %v288 = vunpack.c.h.b16 %v82
    %v289 = vunpack.c.l.b16 %v83
    %v290 = vunpack.c.h.b16 %v83
    %v291 = vunpack.c.l.b16 %v84
    %v292 = vunpack.c.h.b16 %v84
    %v293 = vunpack.c.l.b16 %v85
    %v294 = vunpack.c.h.b16 %v85
    %v295 = vunpack.c.l.b16 %v86
    %v296 = vunpack.c.h.b16 %v86
    %v297 = vunpack.c.l.b16 %v87
    %v298 = vunpack.c.h.b16 %v87
    %v299 = vunpack.c.l.b16 %v88
    %v300 = vunpack.c.h.b16 %v88
    %v301 = vunpack.c.l.b16 %v89
    %v302 = vunpack.c.h.b16 %v89
    %v303 = vunpack.c.l.b16 %v90
    %v304 = vunpack.c.h.b16 %v90
    %v305 = vunpack.c.l.b16 %v91
    %v306 = vunpack.c.h.b16 %v91
    %v307 = vunpack.c.l.b16 %v92
    %v308 = vunpack.c.h.b16 %v92
    %v309 = vunpack.c.l.b16 %v93
    %v310 = vunpack.c.h.b16 %v93
    %v311 = vunpack.c.l.b16 %v94
    %v312 = vunpack.c.h.b16 %v94
    %v313 = vunpack.c.l.b16 %v95
    %v314 = vunpack.c.h.b16 %v95
    %v315 = vunpack.c.l.b16 %v96
    %v316 = vunpack.c.h.b16 %v96
    %v317 = vunpack.c.l.b16 %v97
    %v318 = vunpack.c.h.b16 %v97
    %v319 = vunpack.c.l.b16 %v98
    %v320 = vunpack.c.h.b16 %v98
    %v321 = vunpack.c.l.b16 %v99
    %v322 = vunpack.c.h.b16 %v99
    %v323 = vunpack.c.l.b16 %v100
    %v324 = vunpack.c.h.b16 %v100
    %v325 = vunpack.c.l.b16 %v101
    %v326 = vunpack.c.h.b16 %v101
    %v327 = vunpack.c.l.b16 %v102
    %v328 = vunpack.c.h.b16 %v102
    %v329 = vunpack.c.l.b16 %v103
    %v330 = vunpack.c.h.b16 %v103
    %v331 = vunpack.c.l.b16 %v104
    %v332 = vunpack.c.h.b16 %v104
    %v333 = vunpack.c.l.b16 %v105
    %v334 = vunpack.c.h.b16 %v105
    %v335 = vunpack.c.l.b16 %v106
    %v336 = vunpack.c.h.b16 %v106
    %v337 = vunpack.c.l.b16 %v107
    %v338 = vunpack.c.h.b16 %v107
    %v339 = vunpack.c.l.b16 %v108
    %v340 = vunpack.c.h.b16 %v108
    %v341 = vunpack.c.l.b16 %v109
    %v342 = vunpack.c.h.b16 %v109
    %v343 = vunpack.c.l.b16 %v110
    %v344 = vunpack.c.h.b16 %v110
    %v345 = vunpack.c.l.b16 %v111
    %v346 = vunpack.c.h.b16 %v111
    %v347 = vunpack.c.l.b16 %v112
    %v348 = vunpack.c.h.b16 %v112
    %v349 = vunpack.c.l.b16 %v113
    %v350 = vunpack.c.h.b16 %v113
    %v351 = vunpack.c.l.b16 %v114
    %v352 = vunpack.c.h.b16 %v114
    %v353 = vunpack.c.l.b16 %v115
    %v354 = vunpack.c.h.b16 %v115
    %v355 = vunpack.c.l.b16 %v116
    %v356 = vunpack.c.h.b16 %v116
    %v357 = vunpack.c.l.b16 %v117
    %v358 = vunpack.c.h.b16 %v117
    %v359 = vunpack.c.l.b16 %v118
    %v360 = vunpack.c.h.b16 %v118
    %v361 = vunpack.c.l.b16 %v119
    %v362 = vunpack.c.h.b16 %v119
    %v363 = vunpack.c.l.b16 %v120
    %v364 = vunpack.c.h.b16 %v120
    %v365 = vunpack.c.l.b16 %v121
    %v366 = vunpack.c.h.b16 %v121
    %v367 = vunpack.c.l.b16 %v122
    %v368 = vunpack.c.h.b16 %v122
    %v369 = vunpack.c.l.b16 %v123
    %v370 = vunpack.c.h.b16 %v123
    %v371 = vpack.c.b16 %v245, %v243
    %v372 = vpack.c.b16 %v246, %v244
    %v373 = vpack.c.b16 %v249, %v247
    %v374 = vpack.c.b16 %v250, %v248
    %v375 = vpack.c.b16 %v253, %v251
    %v376 = vpack.c.b16 %v254, %v252
    %v377 = vpack.c.b16 %v257, %v255
    %v378 = vpack.c.b16 %v258, %v256
    %v379 = vpack.c.b16 %v261, %v259
    %v380 = vpack.c.b16 %v262, %v260
    %v381 = vpack.c.b16 %v265, %v263
    %v382 = vpack.c.b16 %v266, %v264
    %v383 = vpack.c.b16 %v269, %v267
    %v384 = vpack.c.b16 %v270, %v268
    %v385 = vpack.c.b16 %v273, %v271
    %v386 = vpack.c.b16 %v274, %v272
    %v387 = vpack.c.b16 %v277, %v275
    %v388 = vpack.c.b16 %v278, %v276
    %v389 = vpack.c.b16 %v281, %v279
    %v390 = vpack.c.b16 %v282, %v280
    %v391 = vpack.c.b16 %v285, %v283
    %v392 = vpack.c.b16 %v286, %v284
    %v393 = vpack.c.b16 %v289, %v287
    %v394 = vpack.c.b16 %v290, %v288
    %v395 = vpack.c.b16 %v293, %v291
    %v396 = vpack.c.b16 %v294, %v292
    %v397 = vpack.c.b16 %v297, %v295
    %v398 = vpack.c.b16 %v298, %v296
    %v399 = vpack.c.b16 %v301, %v299
    %v400 = vpack.c.b16 %v302, %v300
    %v401 = vpack.c.b16 %v305, %v303
    %v402 = vpack.c.b16 %v306, %v304
    %v403 = vpack.c.b16 %v309, %v307
    %v404 = vpack.c.b16 %v310, %v308
    %v405 = vpack.c.b16 %v313, %v311
    %v406 = vpack.c.b16 %v314, %v312
    %v407 = vpack.c.b16 %v317, %v315
    %v408 = vpack.c.b16 %v318, %v316
    %v409 = vpack.c.b16 %v321, %v319
    %v410 = vpack.c.b16 %v322, %v320
    %v411 = vpack.c.b16 %v325, %v323
    %v412 = vpack.c.b16 %v326, %v324
    %v413 = vpack.c.b16 %v329, %v327
    %v414 = vpack.c.b16 %v330, %v328
    %v415 = vpack.c.b16 %v333, %v331
    %v416 = vpack.c.b16 %v334, %v332
    %v417 = vpack.c.b16 %v337, %v335
    %v418 = vpack.c.b16 %v338, %v336
    %v419 = vpack.c.b16 %v341, %v339
    %v420 = vpack.c.b16 %v342, %v340
    %v421 = vpack.c.b16 %v345, %v343
    %v422 = vpack.c.b16 %v346, %v344
    %v423 = vpack.c.b16 %v349, %v347
    %v424 = vpack.c.b16 %v350, %v348
    %v425 = vpack.c.b16 %v353, %v351
    %v426 = vpack.c.b16 %v354, %v352
    %v427 = vpack.c.b16 %v357, %v355
    %v428 = vpack.c.b16 %v358, %v356
    %v429 = vpack.c.b16 %v361, %v359
    %v430 = vpack.c.b16 %v362, %v360
    %v431 = vpack.c.b16 %v365, %v363
    %v432 = vpack.c.b16 %v366, %v364
    %v433 = vpack.c.b16 %v369, %v367
    %v434 = vpack.c.b16 %v370, %v368
    %499 = vmatprep.subr.bf16.mxu0 %v372
    %500 = vmatpush1.bf16.msra.mxu0 %v371
    %501 = vmatprep.subr.bf16.mxu0 %v374
    %502 = vmatpush1.bf16.msra.mxu0 %v373
    %503 = vmatprep.subr.bf16.mxu0 %v376
    %504 = vmatpush1.bf16.msra.mxu0 %v375
    %505 = vmatprep.subr.bf16.mxu0 %v378
    %506 = vmatpush1.bf16.msra.mxu0 %v377
    %507 = vmatprep.subr.bf16.mxu0 %v380
    %508 = vmatpush1.bf16.msra.mxu0 %v379
    %509 = vmatprep.subr.bf16.mxu0 %v382
    %510 = vmatpush1.bf16.msra.mxu0 %v381
    %511 = vmatprep.subr.bf16.mxu0 %v384
    %512 = vmatpush1.bf16.msra.mxu0 %v383
    %513 = vmatprep.subr.bf16.mxu0 %v386
    %514 = vmatpush1.bf16.msra.mxu0 %v385
    %515 = vmatprep.subr.bf16.mxu0 %v388
    %516 = vmatpush1.bf16.msra.mxu0 %v387
    %517 = vmatprep.subr.bf16.mxu0 %v390
    %518 = vmatpush1.bf16.msra.mxu0 %v389
    %519 = vmatprep.subr.bf16.mxu0 %v392
    %520 = vmatpush1.bf16.msra.mxu0 %v391
    %521 = vmatprep.subr.bf16.mxu0 %v394
    %522 = vmatpush1.bf16.msra.mxu0 %v393
    %523 = vmatprep.subr.bf16.mxu0 %v396
    %524 = vmatpush1.bf16.msra.mxu0 %v395
    %525 = vmatprep.subr.bf16.mxu0 %v398
    %526 = vmatpush1.bf16.msra.mxu0 %v397
    %527 = vmatprep.subr.bf16.mxu0 %v400
    %528 = vmatpush1.bf16.msra.mxu0 %v399
    %529 = vmatprep.subr.bf16.mxu0 %v402
    %530 = vmatpush1.bf16.msra.mxu0 %v401
    %531 = vmatprep.mubr.bf16.mxu0 %v57
    %532 = vmatmul.mubr.bf16.gmra.mrb[0].mxu0 %v56
    %v533 = vpop.f32.mrb[0].mxu0
    %v534 = vadd.f32 %v172, %v533
    %v535 = vpop.f32.mrb[0].mxu0
    %v536 = vadd.f32 %v176, %v535
    %v537 = vpop.f32.mrb[0].mxu0
    %v538 = vpop.f32.mrb[0].mxu0
    %539 = vdwg.mxu0
    %540 = vmatprep.subr.bf16.mxu0 %v404
    %541 = vmatpush1.bf16.msra.mxu0 %v403
    %542 = vmatprep.subr.bf16.mxu0 %v406
    %543 = vmatpush1.bf16.msra.mxu0 %v405
    %544 = vmatprep.subr.bf16.mxu0 %v408
    %545 = vmatpush1.bf16.msra.mxu0 %v407
    %546 = vmatprep.subr.bf16.mxu0 %v410
    %547 = vmatpush1.bf16.msra.mxu0 %v409
    %548 = vmatprep.subr.bf16.mxu0 %v412
    %549 = vmatpush1.bf16.msra.mxu0 %v411
    %550 = vmatprep.subr.bf16.mxu0 %v414
    %551 = vmatpush1.bf16.msra.mxu0 %v413
    %552 = vmatprep.subr.bf16.mxu0 %v416
    %553 = vmatpush1.bf16.msra.mxu0 %v415
    %554 = vmatprep.subr.bf16.mxu0 %v418
    %555 = vmatpush1.bf16.msra.mxu0 %v417
    %556 = vmatprep.subr.bf16.mxu0 %v420
    %557 = vmatpush1.bf16.msra.mxu0 %v419
    %558 = vmatprep.subr.bf16.mxu0 %v422
    %559 = vmatpush1.bf16.msra.mxu0 %v421
    %560 = vmatprep.subr.bf16.mxu0 %v424
    %561 = vmatpush1.bf16.msra.mxu0 %v423
    %562 = vmatprep.subr.bf16.mxu0 %v426
    %563 = vmatpush1.bf16.msra.mxu0 %v425
    %564 = vmatprep.subr.bf16.mxu0 %v428
    %565 = vmatpush1.bf16.msra.mxu0 %v427
    %566 = vmatprep.subr.bf16.mxu0 %v430
    %567 = vmatpush1.bf16.msra.mxu0 %v429
    %568 = vmatprep.subr.bf16.mxu0 %v432
    %569 = vmatpush1.bf16.msra.mxu0 %v431
    %570 = vmatprep.subr.bf16.mxu0 %v434
    %571 = vmatpush1.bf16.msra.mxu0 %v433
    %572 = vmatprep.mubr.bf16.mxu0 %v59
    %573 = vmatmul.mubr.bf16.gmra.mrb[0].mxu0 %v58
    %v574 = vpop.f32.mrb[0].mxu0
    %v575 = vadd.f32 %v534, %v574
    %v576 = vpop.f32.mrb[0].mxu0
    %v577 = vadd.f32 %v536, %v576
    %v578 = vpop.f32.mrb[0].mxu0
    %v579 = vpop.f32.mrb[0].mxu0
    %580 = vdwg.mxu0
    %v581 = vmax.f32 %v575, 0.0
    %v582 = vmax.f32 %v577, 0.0
    %vm583 = vcmask 1041408
    %v584 = vsel %vm583, %v581, 0.0
    %v585 = vrot.slane %v584, 4
    %v586 = vadd.f32 %v584, %v585
    %v587 = vrot.slane %v586, 2
    %v588 = vadd.f32 %v586, %v587
    %v589 = vrot.slane %v588, 1
    %v590 = vadd.f32 %v588, %v589
    %v591 = vsel %vm583, %v582, 0.0
    %v592 = vrot.slane %v591, 4
    %v593 = vadd.f32 %v591, %v592
    %v594 = vrot.slane %v593, 2
    %v595 = vadd.f32 %v593, %v594
    %v596 = vrot.slane %v595, 1
    %v597 = vadd.f32 %v595, %v596
    %v598 = vrcp.pop 2.0
    %v599 = vmul.f32 %v590, %v598
    %v600 = vmul.f32 %v597, %v598
    %v601 = vsub.f32 %v581, %v599
    %v602 = vsub.f32 %v582, %v600
    %v603 = vmul.f32 %v601, %v601
    %v604 = vmul.f32 %v602, %v602
    %v605 = vsel %vm583, %v603, 0.0
    %v606 = vrot.slane %v605, 4
    %v607 = vadd.f32 %v605, %v606
    %v608 = vrot.slane %v607, 2
    %v609 = vadd.f32 %v607, %v608
    %v610 = vrot.slane %v609, 1
    %v611 = vadd.f32 %v609, %v610
    %v612 = vsel %vm583, %v604, 0.0
    %v613 = vrot.slane %v612, 4
    %v614 = vadd.f32 %v612, %v613
    %v615 = vrot.slane %v614, 2
    %v616 = vadd.f32 %v614, %v615
    %v617 = vrot.slane %v616, 1
    %v618 = vadd.f32 %v616, %v617
    %v619 = vmul.f32 %v611, %v598
    %v620 = vmul.f32 %v618, %v598
    %v621 = vadd.f32 %v619, 0.2
    %v622 = vadd.f32 %v620, 0.2
    %v623 = vrsqrt.pop %v621
    %v624 = vrsqrt.pop %v622
    %v625 = vmul.f32 %v601, %v623
    %v626 = vmul.f32 %v602, %v624
    %v628 = vlaneseq
    %v629 = vshrl.u32 %v628, 7
    %v630 = vsub.s32 0, %v629
    %v631 = vrot.slane %v158, %v630
    %v632 = vlaneseq
    %v633 = vshrl.u32 %v632, 7
    %v634 = vsub.s32 1, %v633
    %v635 = vrot.slane %v158, %v634
    %v638 = vmul.f32 %v625, %v631
    %v639 = vmul.f32 %v626, %v635
    %v641 = vlaneseq
    %v642 = vshrl.u32 %v641, 7
    %v643 = vsub.s32 0, %v642
    %v644 = vrot.slane %v160, %v643
    %v645 = vlaneseq
    %v646 = vshrl.u32 %v645, 7
    %v647 = vsub.s32 1, %v646
    %v648 = vrot.slane %v160, %v647
    %v651 = vadd.f32 %v638, %v644
    %v652 = vadd.f32 %v639, %v648
    %v653 = vpack.c.bf16 %v651, %v651
    %v654 = vpack.c.bf16 %v652, %v652
    %v656 = vlaneseq
    %v657 = vshrl.u32 %v656, 7
    %v658 = vsub.s32 0, %v657
    %v659 = vrot.slane %v162, %v658
    %v660 = vlaneseq
    %v661 = vshrl.u32 %v660, 7
    %v662 = vsub.s32 1, %v661
    %v663 = vrot.slane %v162, %v662
    %v698 = vunpack.c.l.b16 %v124
    %v699 = vunpack.c.h.b16 %v124
    %v700 = vunpack.c.l.b16 %v125
    %v701 = vunpack.c.h.b16 %v125
    %v702 = vunpack.c.l.b16 %v126
    %v703 = vunpack.c.h.b16 %v126
    %v704 = vunpack.c.l.b16 %v127
    %v705 = vunpack.c.h.b16 %v127
    %v706 = vunpack.c.l.b16 %v128
    %v707 = vunpack.c.h.b16 %v128
    %v708 = vunpack.c.l.b16 %v129
    %v709 = vunpack.c.h.b16 %v129
    %v710 = vunpack.c.l.b16 %v130
    %v711 = vunpack.c.h.b16 %v130
    %v712 = vunpack.c.l.b16 %v131
    %v713 = vunpack.c.h.b16 %v131
    %v714 = vunpack.c.l.b16 %v132
    %v715 = vunpack.c.h.b16 %v132
    %v716 = vunpack.c.l.b16 %v133
    %v717 = vunpack.c.h.b16 %v133
    %v718 = vunpack.c.l.b16 %v134
    %v719 = vunpack.c.h.b16 %v134
    %v720 = vunpack.c.l.b16 %v135
    %v721 = vunpack.c.h.b16 %v135
    %v722 = vunpack.c.l.b16 %v136
    %v723 = vunpack.c.h.b16 %v136
    %v724 = vunpack.c.l.b16 %v137
    %v725 = vunpack.c.h.b16 %v137
    %v726 = vunpack.c.l.b16 %v138
    %v727 = vunpack.c.h.b16 %v138
    %v728 = vunpack.c.l.b16 %v139
    %v729 = vunpack.c.h.b16 %v139
    %v730 = vunpack.c.l.b16 %v140
    %v731 = vunpack.c.h.b16 %v140
    %v732 = vunpack.c.l.b16 %v141
    %v733 = vunpack.c.h.b16 %v141
    %v734 = vunpack.c.l.b16 %v142
    %v735 = vunpack.c.h.b16 %v142
    %v736 = vunpack.c.l.b16 %v143
    %v737 = vunpack.c.h.b16 %v143
    %v738 = vunpack.c.l.b16 %v144
    %v739 = vunpack.c.h.b16 %v144
    %v740 = vunpack.c.l.b16 %v145
    %v741 = vunpack.c.h.b16 %v145
    %v742 = vunpack.c.l.b16 %v146
    %v743 = vunpack.c.h.b16 %v146
    %v744 = vunpack.c.l.b16 %v147
    %v745 = vunpack.c.h.b16 %v147
    %v746 = vunpack.c.l.b16 %v148
    %v747 = vunpack.c.h.b16 %v148
    %v748 = vunpack.c.l.b16 %v149
    %v749 = vunpack.c.h.b16 %v149
    %v750 = vunpack.c.l.b16 %v150
    %v751 = vunpack.c.h.b16 %v150
    %v752 = vunpack.c.l.b16 %v151
    %v753 = vunpack.c.h.b16 %v151
    %v754 = vunpack.c.l.b16 %v152
    %v755 = vunpack.c.h.b16 %v152
    %v756 = vunpack.c.l.b16 %v153
    %v757 = vunpack.c.h.b16 %v153
    %v758 = vunpack.c.l.b16 %v154
    %v759 = vunpack.c.h.b16 %v154
    %v760 = vunpack.c.l.b16 %v155
    %v761 = vunpack.c.h.b16 %v155
    %v762 = vpack.c.b16 %v700, %v698
    %v763 = vpack.c.b16 %v701, %v699
    %v764 = vpack.c.b16 %v704, %v702
    %v765 = vpack.c.b16 %v705, %v703
    %v766 = vpack.c.b16 %v708, %v706
    %v767 = vpack.c.b16 %v709, %v707
    %v768 = vpack.c.b16 %v712, %v710
    %v769 = vpack.c.b16 %v713, %v711
    %v770 = vpack.c.b16 %v716, %v714
    %v771 = vpack.c.b16 %v717, %v715
    %v772 = vpack.c.b16 %v720, %v718
    %v773 = vpack.c.b16 %v721, %v719
    %v774 = vpack.c.b16 %v724, %v722
    %v775 = vpack.c.b16 %v725, %v723
    %v776 = vpack.c.b16 %v728, %v726
    %v777 = vpack.c.b16 %v729, %v727
    %v778 = vpack.c.b16 %v732, %v730
    %v779 = vpack.c.b16 %v733, %v731
    %v780 = vpack.c.b16 %v736, %v734
    %v781 = vpack.c.b16 %v737, %v735
    %v782 = vpack.c.b16 %v740, %v738
    %v783 = vpack.c.b16 %v741, %v739
    %v784 = vpack.c.b16 %v744, %v742
    %v785 = vpack.c.b16 %v745, %v743
    %v786 = vpack.c.b16 %v748, %v746
    %v787 = vpack.c.b16 %v749, %v747
    %v788 = vpack.c.b16 %v752, %v750
    %v789 = vpack.c.b16 %v753, %v751
    %v790 = vpack.c.b16 %v756, %v754
    %v791 = vpack.c.b16 %v757, %v755
    %v792 = vpack.c.b16 %v760, %v758
    %v793 = vpack.c.b16 %v761, %v759
    %826 = vmatprep.subr.bf16.mxu0 %v763
    %827 = vmatpush1.bf16.msra.mxu0 %v762
    %828 = vmatprep.subr.bf16.mxu0 %v765
    %829 = vmatpush1.bf16.msra.mxu0 %v764
    %830 = vmatprep.subr.bf16.mxu0 %v767
    %831 = vmatpush1.bf16.msra.mxu0 %v766
    %832 = vmatprep.subr.bf16.mxu0 %v769
    %833 = vmatpush1.bf16.msra.mxu0 %v768
    %834 = vmatprep.subr.bf16.mxu0 %v771
    %835 = vmatpush1.bf16.msra.mxu0 %v770
    %836 = vmatprep.subr.bf16.mxu0 %v773
    %837 = vmatpush1.bf16.msra.mxu0 %v772
    %838 = vmatprep.subr.bf16.mxu0 %v775
    %839 = vmatpush1.bf16.msra.mxu0 %v774
    %840 = vmatprep.subr.bf16.mxu0 %v777
    %841 = vmatpush1.bf16.msra.mxu0 %v776
    %842 = vmatprep.subr.bf16.mxu0 %v779
    %843 = vmatpush1.bf16.msra.mxu0 %v778
    %844 = vmatprep.subr.bf16.mxu0 %v781
    %845 = vmatpush1.bf16.msra.mxu0 %v780
    %846 = vmatprep.subr.bf16.mxu0 %v783
    %847 = vmatpush1.bf16.msra.mxu0 %v782
    %848 = vmatprep.subr.bf16.mxu0 %v785
    %849 = vmatpush1.bf16.msra.mxu0 %v784
    %850 = vmatprep.subr.bf16.mxu0 %v787
    %851 = vmatpush1.bf16.msra.mxu0 %v786
    %852 = vmatprep.subr.bf16.mxu0 %v789
    %853 = vmatpush1.bf16.msra.mxu0 %v788
    %854 = vmatprep.subr.bf16.mxu0 %v791
    %855 = vmatpush1.bf16.msra.mxu0 %v790
    %856 = vmatprep.subr.bf16.mxu0 %v793
    %857 = vmatpush1.bf16.msra.mxu0 %v792
    %858 = vmatprep.mubr.bf16.mxu0 %v654
    %859 = vmatmul.mubr.bf16.gmra.mrb[0].mxu0 %v653
    %v860 = vpop.f32.mrb[0].mxu0
    %v861 = vadd.f32 %v659, %v860
    %v862 = vpop.f32.mrb[0].mxu0
    %v863 = vadd.f32 %v663, %v862
    %v864 = vpop.f32.mrb[0].mxu0
    %v865 = vpop.f32.mrb[0].mxu0
    %866 = vdwg.mxu0
    %v867 = vmax.f32 %v861, 0.0
    %v868 = vmax.f32 %v863, 0.0
    %v869 = vsel %vm583, %v867, 0.0
    %v870 = vrot.slane %v869, 4
    %v871 = vadd.f32 %v869, %v870
    %v872 = vrot.slane %v871, 2
    %v873 = vadd.f32 %v871, %v872
    %v874 = vrot.slane %v873, 1
    %v875 = vadd.f32 %v873, %v874
    %v876 = vsel %vm583, %v868, 0.0
    %v877 = vrot.slane %v876, 4
    %v878 = vadd.f32 %v876, %v877
    %v879 = vrot.slane %v878, 2
    %v880 = vadd.f32 %v878, %v879
    %v881 = vrot.slane %v880, 1
    %v882 = vadd.f32 %v880, %v881
    %v883 = vmul.f32 %v875, %v598
    %v884 = vmul.f32 %v882, %v598
    %v885 = vsub.f32 %v867, %v883
    %v886 = vsub.f32 %v868, %v884
    %v887 = vmul.f32 %v885, %v885
    %v888 = vmul.f32 %v886, %v886
    %v889 = vsel %vm583, %v887, 0.0
    %v890 = vrot.slane %v889, 4
    %v891 = vadd.f32 %v889, %v890
    %v892 = vrot.slane %v891, 2
    %v893 = vadd.f32 %v891, %v892
    %v894 = vrot.slane %v893, 1
    %v895 = vadd.f32 %v893, %v894
    %v896 = vsel %vm583, %v888, 0.0
    %v897 = vrot.slane %v896, 4
    %v898 = vadd.f32 %v896, %v897
    %v899 = vrot.slane %v898, 2
    %v900 = vadd.f32 %v898, %v899
    %v901 = vrot.slane %v900, 1
    %v902 = vadd.f32 %v900, %v901
    %v903 = vmul.f32 %v895, %v598
    %v904 = vmul.f32 %v902, %v598
    %v905 = vadd.f32 %v903, 0.2
    %v906 = vadd.f32 %v904, 0.2
    %v907 = vrsqrt.pop %v905
    %v908 = vrsqrt.pop %v906
    %v909 = vmul.f32 %v885, %v907
    %v910 = vmul.f32 %v886, %v908
    %v912 = vlaneseq
    %v913 = vshrl.u32 %v912, 7
    %v914 = vsub.s32 0, %v913
    %v915 = vrot.slane %v164, %v914
    %v916 = vlaneseq
    %v917 = vshrl.u32 %v916, 7
    %v918 = vsub.s32 1, %v917
    %v919 = vrot.slane %v164, %v918
    %v922 = vmul.f32 %v909, %v915
    %v923 = vmul.f32 %v910, %v919
    %v925 = vlaneseq
    %v926 = vshrl.u32 %v925, 7
    %v927 = vsub.s32 0, %v926
    %v928 = vrot.slane %v166, %v927
    %v929 = vlaneseq
    %v930 = vshrl.u32 %v929, 7
    %v931 = vsub.s32 1, %v930
    %v932 = vrot.slane %v166, %v931
    %v935 = vadd.f32 %v922, %v928
    %v936 = vadd.f32 %v923, %v932
    %v937 = vpack.c.bf16 %v935, %v935
    %v938 = vpack.c.bf16 %v936, %v936
    %v939 = vld [vmem:[%s2] sm:$0xf]
    %v940 = vld [vmem:[%s2 + $0x4] sm:$0xf]
    %v941 = vld [vmem:[%s2 + $0x8] sm:$0xf]
    %v942 = vld [vmem:[%s2 + $0xc] sm:$0xf]
    %v943 = vld [vmem:[%s2 + $0x10] sm:$0xf]
    %v944 = vld [vmem:[%s2 + $0x14] sm:$0xf]
    %v945 = vld [vmem:[%s2 + $0x18] sm:$0xf]
    %v946 = vld [vmem:[%s2 + $0x1c] sm:$0xf]
    %v947 = vld [vmem:[%s2 + $0x20] sm:$0xf]
    %v948 = vld [vmem:[%s2 + $0x24] sm:$0xf]
    %v949 = vld [vmem:[%s2 + $0x28] sm:$0xf]
    %v950 = vld [vmem:[%s2 + $0x2c] sm:$0xf]
    %v951 = vld [vmem:[%s2 + $0x30] sm:$0xf]
    %v952 = vld [vmem:[%s2 + $0x34] sm:$0xf]
    %v953 = vld [vmem:[%s2 + $0x38] sm:$0xf]
    %v954 = vld [vmem:[%s2 + $0x3c] sm:$0xf]
    %v955 = vld [vmem:[%s2 + $0x40] sm:$0xf]
    %v956 = vld [vmem:[%s2 + $0x44] sm:$0xf]
    %v957 = vld [vmem:[%s2 + $0x48] sm:$0xf]
    %v958 = vld [vmem:[%s2 + $0x4c] sm:$0xf]
    %v959 = vld [vmem:[%s2 + $0x50] sm:$0xf]
    %v960 = vld [vmem:[%s2 + $0x54] sm:$0xf]
    %v961 = vld [vmem:[%s2 + $0x58] sm:$0xf]
    %v962 = vld [vmem:[%s2 + $0x5c] sm:$0xf]
    %v963 = vld [vmem:[%s2 + $0x60] sm:$0xf]
    %v964 = vld [vmem:[%s2 + $0x64] sm:$0xf]
    %v965 = vld [vmem:[%s2 + $0x68] sm:$0xf]
    %v966 = vld [vmem:[%s2 + $0x6c] sm:$0xf]
    %v967 = vld [vmem:[%s2 + $0x70] sm:$0xf]
    %v968 = vld [vmem:[%s2 + $0x74] sm:$0xf]
    %v969 = vld [vmem:[%s2 + $0x78] sm:$0xf]
    %v970 = vld [vmem:[%s2 + $0x7c] sm:$0xf]
    %v1003 = vunpack.c.l.b16 %v939
    %v1004 = vunpack.c.l.b16 %v940
    %v1005 = vunpack.c.l.b16 %v941
    %v1006 = vunpack.c.l.b16 %v942
    %v1007 = vunpack.c.l.b16 %v943
    %v1008 = vunpack.c.l.b16 %v944
    %v1009 = vunpack.c.l.b16 %v945
    %v1010 = vunpack.c.l.b16 %v946
    %v1011 = vunpack.c.l.b16 %v947
    %v1012 = vunpack.c.l.b16 %v948
    %v1013 = vunpack.c.l.b16 %v949
    %v1014 = vunpack.c.l.b16 %v950
    %v1015 = vunpack.c.l.b16 %v951
    %v1016 = vunpack.c.l.b16 %v952
    %v1017 = vunpack.c.l.b16 %v953
    %v1018 = vunpack.c.l.b16 %v954
    %v1019 = vunpack.c.l.b16 %v955
    %v1020 = vunpack.c.l.b16 %v956
    %v1021 = vunpack.c.l.b16 %v957
    %v1022 = vunpack.c.l.b16 %v958
    %v1023 = vunpack.c.l.b16 %v959
    %v1024 = vunpack.c.l.b16 %v960
    %v1025 = vunpack.c.l.b16 %v961
    %v1026 = vunpack.c.l.b16 %v962
    %v1027 = vunpack.c.l.b16 %v963
    %v1028 = vunpack.c.l.b16 %v964
    %v1029 = vunpack.c.l.b16 %v965
    %v1030 = vunpack.c.l.b16 %v966
    %v1031 = vunpack.c.l.b16 %v967
    %v1032 = vunpack.c.l.b16 %v968
    %v1033 = vunpack.c.l.b16 %v969
    %v1034 = vunpack.c.l.b16 %v970
    %v1035 = vpack.c.b16 %v1004, %v1003
    %v1036 = vpack.c.b16 %v1006, %v1005
    %v1037 = vpack.c.b16 %v1008, %v1007
    %v1038 = vpack.c.b16 %v1010, %v1009
    %v1039 = vpack.c.b16 %v1012, %v1011
    %v1040 = vpack.c.b16 %v1014, %v1013
    %v1041 = vpack.c.b16 %v1016, %v1015
    %v1042 = vpack.c.b16 %v1018, %v1017
    %v1043 = vpack.c.b16 %v1020, %v1019
    %v1044 = vpack.c.b16 %v1022, %v1021
    %v1045 = vpack.c.b16 %v1024, %v1023
    %v1046 = vpack.c.b16 %v1026, %v1025
    %v1047 = vpack.c.b16 %v1028, %v1027
    %v1048 = vpack.c.b16 %v1030, %v1029
    %v1049 = vpack.c.b16 %v1032, %v1031
    %v1050 = vpack.c.b16 %v1034, %v1033
    %1067 = vmatprep.subr.bf16.mxu0 0
    %1068 = vmatpush1.bf16.msra.mxu0 %v1035
    %1069 = vmatprep.subr.bf16.mxu0 0
    %1070 = vmatpush1.bf16.msra.mxu0 %v1036
    %1071 = vmatprep.subr.bf16.mxu0 0
    %1072 = vmatpush1.bf16.msra.mxu0 %v1037
    %1073 = vmatprep.subr.bf16.mxu0 0
    %1074 = vmatpush1.bf16.msra.mxu0 %v1038
    %1075 = vmatprep.subr.bf16.mxu0 0
    %1076 = vmatpush1.bf16.msra.mxu0 %v1039
    %1077 = vmatprep.subr.bf16.mxu0 0
    %1078 = vmatpush1.bf16.msra.mxu0 %v1040
    %1079 = vmatprep.subr.bf16.mxu0 0
    %1080 = vmatpush1.bf16.msra.mxu0 %v1041
    %1081 = vmatprep.subr.bf16.mxu0 0
    %1082 = vmatpush1.bf16.msra.mxu0 %v1042
    %1083 = vmatprep.subr.bf16.mxu0 0
    %1084 = vmatpush1.bf16.msra.mxu0 %v1043
    %1085 = vmatprep.subr.bf16.mxu0 0
    %1086 = vmatpush1.bf16.msra.mxu0 %v1044
    %1087 = vmatprep.subr.bf16.mxu0 0
    %1088 = vmatpush1.bf16.msra.mxu0 %v1045
    %1089 = vmatprep.subr.bf16.mxu0 0
    %1090 = vmatpush1.bf16.msra.mxu0 %v1046
    %1091 = vmatprep.subr.bf16.mxu0 0
    %1092 = vmatpush1.bf16.msra.mxu0 %v1047
    %1093 = vmatprep.subr.bf16.mxu0 0
    %1094 = vmatpush1.bf16.msra.mxu0 %v1048
    %1095 = vmatprep.subr.bf16.mxu0 0
    %1096 = vmatpush1.bf16.msra.mxu0 %v1049
    %1097 = vmatprep.subr.bf16.mxu0 0
    %1098 = vmatpush1.bf16.msra.mxu0 %v1050
    %1099 = vmatprep.mubr.bf16.mxu0 %v938
    %1100 = vmatmul.mubr.bf16.gmra.mrb[0].mxu0 %v937
    %v1101 = vpop.f32.mrb[0].mxu0
    %v1102 = vadd.f32 %v167, %v1101
    %v1103 = vpop.f32.mrb[0].mxu0
    %v1104 = vpop.f32.mrb[0].mxu0
    %v1105 = vpop.f32.mrb[0].mxu0
    %1106 = vdwg.mxu0
    %v1107 = vlaneseq
    %v1108 = vand.u32 %v1107, 127
    %vm1109 = vcmp.ge.s32.totalorder %v1108, 0
    %vm1110 = vcmp.lt.s32.totalorder %v1108, 3
    %vm1111 = vmand %vm1109, %vm1110
    %vm1112 = vcmp.ge.s32.totalorder %v1108, 3
    %vm1113 = vcmp.lt.s32.totalorder %v1108, 6
    %vm1114 = vmand %vm1112, %vm1113
    %vm1115 = vcmp.ge.s32.totalorder %v1108, 6
    %vm1116 = vcmp.lt.s32.totalorder %v1108, 12
    %vm1117 = vmand %vm1115, %vm1116
    %vm1118 = vcmp.ge.s32.totalorder %v1108, 12
    %vm1119 = vcmp.lt.s32.totalorder %v1108, 16
    %vm1120 = vmand %vm1118, %vm1119
    %v1121 = vsel %vm1111, 1, 0
    %vm1122 = vcmp.eq.s32.totalorder %v1121, 1
    %v1123 = vsel %vm1122, %v1102, -inf
    %vm1124 = vcmask 123904
    %v1125 = vsel %vm1124, %v1123, -inf
    %1126 = vmax.xlane.f32.xlu0 %v1125
    %v1127 = vpop.xlane.xlu0 %1126
    %v1128 = vsel %vm1122, %v1127, 0.0
    %v1129 = vsel %vm1114, 1, 0
    %vm1130 = vcmp.eq.s32.totalorder %v1129, 1
    %v1131 = vsel %vm1130, %v1102, -inf
    %v1132 = vsel %vm1124, %v1131, -inf
    %1133 = vmax.xlane.f32.xlu0 %v1132
    %v1134 = vpop.xlane.xlu0 %1133
    %v1135 = vsel %vm1130, %v1134, %v1128
    %v1136 = vsel %vm1117, 1, 0
    %vm1137 = vcmp.eq.s32.totalorder %v1136, 1
    %v1138 = vsel %vm1137, %v1102, -inf
    %v1139 = vsel %vm1124, %v1138, -inf
    %1140 = vmax.xlane.f32.xlu0 %v1139
    %v1141 = vpop.xlane.xlu0 %1140
    %v1142 = vsel %vm1137, %v1141, %v1135
    %v1143 = vsel %vm1120, 1, 0
    %vm1144 = vcmp.eq.s32.totalorder %v1143, 1
    %v1145 = vsel %vm1144, %v1102, -inf
    %v1146 = vsel %vm1124, %v1145, -inf
    %1147 = vmax.xlane.f32.xlu0 %v1146
    %v1148 = vpop.xlane.xlu0 %1147
    %v1149 = vsel %vm1144, %v1148, %v1142
    %v1150 = vsub.f32 %v1102, %v1149
    %v1151 = vmul.f32 %v1150, 1.442695
    %v1152 = vpow.pop %v1151
    %v1153 = vsel %vm1122, %v1152, 0.0
    %v1154 = vsel %vm1124, %v1153, 0.0
    %1155 = vadd.xlane.f32.xlu0 %v1154
    %v1156 = vpop.xlane.xlu0 %1155
    %v1157 = vsel %vm1122, %v1156, 1.0
    %v1158 = vsel %vm1130, %v1152, 0.0
    %v1159 = vsel %vm1124, %v1158, 0.0
    %1160 = vadd.xlane.f32.xlu0 %v1159
    %v1161 = vpop.xlane.xlu0 %1160
    %v1162 = vsel %vm1130, %v1161, %v1157
    %v1163 = vsel %vm1137, %v1152, 0.0
    %v1164 = vsel %vm1124, %v1163, 0.0
    %1165 = vadd.xlane.f32.xlu0 %v1164
    %v1166 = vpop.xlane.xlu0 %1165
    %v1167 = vsel %vm1137, %v1166, %v1162
    %v1168 = vsel %vm1144, %v1152, 0.0
    %v1169 = vsel %vm1124, %v1168, 0.0
    %1170 = vadd.xlane.f32.xlu0 %v1169
    %v1171 = vpop.xlane.xlu0 %1170
    %v1172 = vsel %vm1144, %v1171, %v1167
    %v1173 = vrcp.pop %v1172
    %v1174 = vmul.f32 %v1152, %v1173
    %1175 = vst.msk [vmem:[#allocation5] sm:$0x3] %vm1124, %v1174
    // Predicated region
    $region22: #{tpu_custom_call.1} parent=1 // pred_check
      _
    $region23: #{tpu_custom_call.1} parent=1 // pred_check_branch
      %1177 = sbr.rel (0) target = $region25
    $region24: #{tpu_custom_call.1} parent=1 // pred_region
      %s1179 = ssub.s32 32, 32
      %1180 = vsyncadd [#allocation4], %s1179
      %s1182 = sshll.u32 [#allocation5], 4
      %s1183 = int_to_ptr.vmem [resolvable:$true] %s1182
      %1185 = dma.vmem_to_hbm [thread:$0]  %s1183, 32, %s4, [#allocation4]
    $region25: #{tpu_custom_call.1} parent=1 // pred_fallthru
      _
    // Predicated region
    $region26: #{tpu_custom_call.1} parent=1 // pred_check
      _
    $region27: #{tpu_custom_call.1} parent=1 // pred_check_branch
      %1187 = sbr.rel (0) target = $region29
    $region28: #{tpu_custom_call.1} parent=1 // pred_region
      %1188 = dma.done [#allocation4], 32
    $region29: #{tpu_custom_call.1} parent=1 // pred_fallthru
      _
    %1189 = vsyncpa [#allocation3], 1
    %1190 = vsyncpa [#allocation4], 1

</llo_original>
